<compile_context>
chip_gen: v5e
topology: v5e:2x2
jax: 0.10.0
libtpu: 0.0.40
codegen_flags: <defaults>
</compile_context>

<pallas_src>
import functools
import math

import jax
import jax.numpy as jnp
from jax import lax
from jax.experimental import pallas as pl
from jax.experimental.pallas import tpu as pltpu


def _tcn_fused_kernel(x_ref, w1_ref, b1_ref, w2_ref, b2_ref, o_ref,
                      xpad_ref, hpad_ref, *, kernel_size, dilations, max_pad,
                      negative_slope):
    """Fused TCN forward for a single batch element.

    x_ref:    (C, T)                 block input
    w*_ref:   (L, k, C, C)           conv weights, layer- then tap-major
    b*_ref:   (L, C, 1)
    o_ref:    (C, T)
    xpad_ref: (C, T + max_pad) f32   left-zero-padded current-layer input
    hpad_ref: (C, T + max_pad) f32   left-zero-padded intermediate h
    """
    C, T = o_ref.shape

    def leaky(v):
        return jnp.where(v > 0, v, negative_slope * v)

    def causal_conv(inp_ref, inp_val, w_ref, b_ref, layer, d):
        # Unshifted tap (j = k-1) comes straight from registers.
        acc = jnp.dot(w_ref[layer, kernel_size - 1].astype(jnp.float32),
                      inp_val, preferred_element_type=jnp.float32)
        for j in range(kernel_size - 1):
            start = max_pad - (kernel_size - 1 - j) * d   # static, >= 0
            tap = inp_ref[:, start:start + T]
            acc = acc + jnp.dot(w_ref[layer, j].astype(jnp.float32), tap,
                                preferred_element_type=jnp.float32)
        return acc + b_ref[layer].astype(jnp.float32)     # (C,1) bcast over T

    # Zero the left halo once; it is never overwritten afterwards.
    if max_pad > 0:
        xpad_ref[:, :max_pad] = jnp.zeros((C, max_pad), jnp.float32)
        hpad_ref[:, :max_pad] = jnp.zeros((C, max_pad), jnp.float32)

    cur = x_ref[...].astype(jnp.float32)                  # current layer input

    for layer, d in enumerate(dilations):
        # Stage current input into the padded scratch so causal taps are
        # static slices.
        xpad_ref[:, max_pad:] = cur

        # conv1 -> chomp -> LeakyReLU     (Dropout(p=0.0) is identity)
        h = leaky(causal_conv(xpad_ref, cur, w1_ref, b1_ref, layer, d))

        # Stage h for conv2's shifted taps.
        hpad_ref[:, max_pad:] = h

        # conv2 -> chomp -> + residual -> LeakyReLU
        cur = leaky(causal_conv(hpad_ref, h, w2_ref, b2_ref, layer, d) + cur)

    o_ref[...] = cur.astype(o_ref.dtype)


def tcn_forward(x, w1_all, b1_all, w2_all, b2_all, *, kernel_size, dilations,
                negative_slope=0.01):
    """Full TCN forward via a single pallas_call.  x: [B, C, T]."""
    B, C, T = x.shape
    L, K, Co, Ci = w1_all.shape
    assert K == kernel_size and Ci == C and Co == C and L == len(dilations)
    max_pad = (kernel_size - 1) * max(dilations) if dilations else 0

    kernel = functools.partial(
        _tcn_fused_kernel, kernel_size=kernel_size, dilations=tuple(dilations),
        max_pad=max_pad, negative_slope=negative_slope)

    return pl.pallas_call(
        kernel,
        out_shape=jax.ShapeDtypeStruct((B, C, T), x.dtype),
        grid_spec=pltpu.PrefetchScalarGridSpec(
            num_scalar_prefetch=0,
            grid=(B,),
            in_specs=[
                pl.BlockSpec((None, C, T), lambda b: (b, 0, 0)),
                pl.BlockSpec((L, kernel_size, C, C), lambda b: (0, 0, 0, 0)),
                pl.BlockSpec((L, C, 1), lambda b: (0, 0, 0)),
                pl.BlockSpec((L, kernel_size, C, C), lambda b: (0, 0, 0, 0)),
                pl.BlockSpec((L, C, 1), lambda b: (0, 0, 0)),
            ],
            out_specs=pl.BlockSpec((None, C, T), lambda b: (b, 0, 0)),
            scratch_shapes=[pltpu.VMEM((C, T + max_pad), jnp.float32),
                            pltpu.VMEM((C, T + max_pad), jnp.float32)],
        ),
        compiler_params=pltpu.CompilerParams(
            dimension_semantics=("parallel",),
        ),
    )(x, w1_all, b1_all, w2_all, b2_all)


class TCN:
    """JAX/Pallas port of the PyTorch TCN (stack of TemporalBlocks)."""

    def __init__(self, num_inputs, num_channels, kernel_size=2, dropout=0.0, *, key):
        assert dropout == 0.0  # Dropout(p=0.0) is identity (module default)
        self.kernel_size = kernel_size
        self.blocks = []
        in_ch = num_inputs
        for i, out_ch in enumerate(num_channels):
            # The PyTorch module has no downsample conv: the residual add
            # requires matching channel counts (otherwise the reference module
            # itself errors), so all blocks share one channel width.
            assert out_ch == in_ch, "residual add requires n_inputs == n_outputs"
            dilation = 2 ** i
            key, k1, k2, k3, k4 = jax.random.split(key, 5)
            bound1 = 1.0 / math.sqrt(in_ch * kernel_size)
            bound2 = 1.0 / math.sqrt(out_ch * kernel_size)
            self.blocks.append(dict(
                w1=jax.random.uniform(k1, (out_ch, in_ch, kernel_size),
                                      jnp.float32, -bound1, bound1),
                b1=jax.random.uniform(k2, (out_ch,), jnp.float32, -bound1, bound1),
                w2=jax.random.uniform(k3, (out_ch, out_ch, kernel_size),
                                      jnp.float32, -bound2, bound2),
                b2=jax.random.uniform(k4, (out_ch,), jnp.float32, -bound2, bound2),
                dilation=dilation,
            ))
            in_ch = out_ch

        C = num_inputs
        # Stack weights layer- and tap-major once, for the fused kernel:
        #   (L, k, C_out, C_in) and (L, C_out, 1).
        self.dilations = tuple(b["dilation"] for b in self.blocks)
        self.w1_all = jnp.stack([jnp.transpose(b["w1"], (2, 0, 1)) for b in self.blocks])
        self.w2_all = jnp.stack([jnp.transpose(b["w2"], (2, 0, 1)) for b in self.blocks])
        self.b1_all = jnp.stack([b["b1"].reshape(C, 1) for b in self.blocks])
        self.b2_all = jnp.stack([b["b2"].reshape(C, 1) for b in self.blocks])

    def __call__(self, x):
        return tcn_forward(x, self.w1_all, self.b1_all, self.w2_all, self.b2_all,
                           kernel_size=self.kernel_size, dilations=self.dilations)


def _tcn_reference(x, blocks, kernel_size, negative_slope=0.01):
    """Pure-JAX reference mirroring the PyTorch forward (conv -> chomp -> ...)."""
    for blk in blocks:
        d = blk["dilation"]
        p = (kernel_size - 1) * d
        T = x.shape[-1]

        def conv(inp, w, b):
            out = lax.conv_general_dilated(
                inp, w, window_strides=(1,), padding=[(p, p)],
                rhs_dilation=(d,), dimension_numbers=("NCH", "OIH", "NCH"),
                precision=lax.Precision.HIGHEST)
            return out + b.reshape(1, -1, 1)

        residual = x
        out = conv(x, blk["w1"], blk["b1"])[:, :, :T]             # chomp1
        out = jnp.where(out > 0, out, negative_slope * out)       # LeakyReLU
        out = conv(out, blk["w2"], blk["b2"])[:, :, :T]           # chomp2
        out = out + residual
        out = jnp.where(out > 0, out, negative_slope * out)
        x = out
    return x


if __name__ == "__main__":
    key = jax.random.PRNGKey(0)
    k_x, k_w = jax.random.split(key)

    # Small shapes implied by the module: x is [batch, channels, time].
    # T is a multiple of 128 so the time axis is lane-dense.
    B, C, T = 2, 32, 128
    num_channels = [C, C]          # residual add requires matching channels
    x = jax.random.normal(k_x, (B, C, T), dtype=jnp.float32)

    model = TCN(num_inputs=C, num_channels=num_channels, kernel_size=2,
                dropout=0.0, key=k_w)

    y = jax.block_until_ready(model(x))
    assert y.shape == (B, C, T)

    ref = _tcn_reference(x, model.blocks, model.kernel_size)
    max_err = float(jnp.max(jnp.abs(y - ref)))
    assert max_err < 2e-2, f"TCN mismatch: max abs err {max_err}"

    print("KERNEL_OK")
</pallas_src>

<mosaic_0001>
module attributes {stable_mosaic.version = 11 : i64} {
  func.func @_tcn_fused_kernel(%arg0: i32, %arg1: memref<1x32x128xf32, #tpu.memory_space<vmem>>, %arg2: memref<2x2x32x32xf32, #tpu.memory_space<vmem>>, %arg3: memref<2x32x1xf32, #tpu.memory_space<vmem>>, %arg4: memref<2x2x32x32xf32, #tpu.memory_space<vmem>>, %arg5: memref<2x32x1xf32, #tpu.memory_space<vmem>>, %arg6: memref<1x32x128xf32, #tpu.memory_space<vmem>>, %arg7: memref<32x130xf32, #tpu.memory_space<vmem>>, %arg8: memref<32x130xf32, #tpu.memory_space<vmem>>) attributes {dimension_semantics = [#tpu.dimension_semantics<parallel>], iteration_bounds = array<i64: 2>, scalar_prefetch = 0 : i64, scratch_operands = 2 : i64, tpu.core_type = #tpu.core_type<tc>, window_params = [{transform_indices = @transform_0, window_bounds = array<i64: 1, 32, 128>}, {pipeline_mode = #tpu.pipeline_mode<synchronous>, transform_indices = @transform_1, window_bounds = array<i64: 2, 2, 32, 32>}, {pipeline_mode = #tpu.pipeline_mode<synchronous>, transform_indices = @transform_2, window_bounds = array<i64: 2, 32, 1>}, {pipeline_mode = #tpu.pipeline_mode<synchronous>, transform_indices = @transform_3, window_bounds = array<i64: 2, 2, 32, 32>}, {pipeline_mode = #tpu.pipeline_mode<synchronous>, transform_indices = @transform_4, window_bounds = array<i64: 2, 32, 1>}, {transform_indices = @transform_5, window_bounds = array<i64: 1, 32, 128>}]} {
    %cst = arith.constant 0.000000e+00 : f32
    %0 = vector.broadcast %cst : f32 to vector<32x2xf32>
    %c0 = arith.constant 0 : index
    %c0_0 = arith.constant 0 : index
    %1 = vector.load %arg7[%c0, %c0_0] : memref<32x130xf32, #tpu.memory_space<vmem>>, vector<32x2xf32>
    tpu.vector_store %arg7[%c0, %c0_0], %0 {strides = array<i32>} : memref<32x130xf32, #tpu.memory_space<vmem>>, vector<32x2xf32>,
    %cst_1 = arith.constant 0.000000e+00 : f32
    %2 = vector.broadcast %cst_1 : f32 to vector<32x2xf32>
    %c0_2 = arith.constant 0 : index
    %c0_3 = arith.constant 0 : index
    %3 = vector.load %arg8[%c0_2, %c0_3] : memref<32x130xf32, #tpu.memory_space<vmem>>, vector<32x2xf32>
    tpu.vector_store %arg8[%c0_2, %c0_3], %2 {strides = array<i32>} : memref<32x130xf32, #tpu.memory_space<vmem>>, vector<32x2xf32>,
    %c0_4 = arith.constant 0 : index
    %c0_5 = arith.constant 0 : index
    %c0_6 = arith.constant 0 : index
    %4 = vector.load %arg1[%c0_4, %c0_5, %c0_6] : memref<1x32x128xf32, #tpu.memory_space<vmem>>, vector<1x32x128xf32>
    %5 = vector.shape_cast %4 : vector<1x32x128xf32> to vector<32x128xf32>
    %c0_7 = arith.constant 0 : index
    %c2 = arith.constant 2 : index
    %6 = vector.load %arg7[%c0_7, %c2] : memref<32x130xf32, #tpu.memory_space<vmem>>, vector<32x128xf32>
    tpu.vector_store %arg7[%c0_7, %c2], %5 {strides = array<i32>} : memref<32x130xf32, #tpu.memory_space<vmem>>, vector<32x128xf32>,
    %c0_8 = arith.constant 0 : index
    %c1 = arith.constant 1 : index
    %c0_9 = arith.constant 0 : index
    %c0_10 = arith.constant 0 : index
    %7 = vector.load %arg2[%c0_8, %c1, %c0_9, %c0_10] : memref<2x2x32x32xf32, #tpu.memory_space<vmem>>, vector<1x1x32x32xf32>
    %8 = vector.shape_cast %7 : vector<1x1x32x32xf32> to vector<32x32xf32>
    %cst_11 = arith.constant dense<0.000000e+00> : vector<32x128xf32>
    %9 = tpu.matmul %8, %5, %cst_11 {dimension_numbers = #tpu.dot_dimension_numbers<[1], [0], [0], [1], [0, 0, 1, 1], [], []>} : vector<32x32xf32>, vector<32x128xf32>, vector<32x128xf32> -> vector<32x128xf32>
    %c0_12 = arith.constant 0 : index
    %c1_13 = arith.constant 1 : index
    %10 = vector.load %arg7[%c0_12, %c1_13] : memref<32x130xf32, #tpu.memory_space<vmem>>, vector<32x128xf32>
    %c0_14 = arith.constant 0 : index
    %c0_15 = arith.constant 0 : index
    %c0_16 = arith.constant 0 : index
    %c0_17 = arith.constant 0 : index
    %11 = vector.load %arg2[%c0_14, %c0_15, %c0_16, %c0_17] : memref<2x2x32x32xf32, #tpu.memory_space<vmem>>, vector<1x1x32x32xf32>
    %12 = vector.shape_cast %11 : vector<1x1x32x32xf32> to vector<32x32xf32>
    %cst_18 = arith.constant dense<0.000000e+00> : vector<32x128xf32>
    %13 = tpu.matmul %12, %10, %cst_18 {dimension_numbers = #tpu.dot_dimension_numbers<[1], [0], [0], [1], [0, 0, 1, 1], [], []>} : vector<32x32xf32>, vector<32x128xf32>, vector<32x128xf32> -> vector<32x128xf32>
    %14 = arith.addf %9, %13 : vector<32x128xf32>
    %c0_19 = arith.constant 0 : index
    %c0_20 = arith.constant 0 : index
    %c0_21 = arith.constant 0 : index
    %15 = vector.load %arg3[%c0_19, %c0_20, %c0_21] : memref<2x32x1xf32, #tpu.memory_space<vmem>>, vector<1x32x1xf32>
    %16 = vector.shape_cast %15 : vector<1x32x1xf32> to vector<32x1xf32>
    %17 = vector.broadcast %16 : vector<32x1xf32> to vector<32x128xf32>
    %18 = arith.addf %14, %17 : vector<32x128xf32>
    %cst_22 = arith.constant 0.000000e+00 : f32
    %19 = vector.broadcast %cst_22 : f32 to vector<32x128xf32>
    %20 = arith.cmpf ogt, %18, %19 : vector<32x128xf32>
    %cst_23 = arith.constant 0.00999999977 : f32
    %21 = vector.broadcast %cst_23 : f32 to vector<32x128xf32>
    %22 = arith.mulf %21, %18 : vector<32x128xf32>
    %23 = arith.select %20, %18, %22 : vector<32x128xi1>, vector<32x128xf32>
    %c0_24 = arith.constant 0 : index
    %c2_25 = arith.constant 2 : index
    %24 = vector.load %arg8[%c0_24, %c2_25] : memref<32x130xf32, #tpu.memory_space<vmem>>, vector<32x128xf32>
    tpu.vector_store %arg8[%c0_24, %c2_25], %23 {strides = array<i32>} : memref<32x130xf32, #tpu.memory_space<vmem>>, vector<32x128xf32>,
    %c0_26 = arith.constant 0 : index
    %c1_27 = arith.constant 1 : index
    %c0_28 = arith.constant 0 : index
    %c0_29 = arith.constant 0 : index
    %25 = vector.load %arg4[%c0_26, %c1_27, %c0_28, %c0_29] : memref<2x2x32x32xf32, #tpu.memory_space<vmem>>, vector<1x1x32x32xf32>
    %26 = vector.shape_cast %25 : vector<1x1x32x32xf32> to vector<32x32xf32>
    %cst_30 = arith.constant dense<0.000000e+00> : vector<32x128xf32>
    %27 = tpu.matmul %26, %23, %cst_30 {dimension_numbers = #tpu.dot_dimension_numbers<[1], [0], [0], [1], [0, 0, 1, 1], [], []>} : vector<32x32xf32>, vector<32x128xf32>, vector<32x128xf32> -> vector<32x128xf32>
    %c0_31 = arith.constant 0 : index
    %c1_32 = arith.constant 1 : index
    %28 = vector.load %arg8[%c0_31, %c1_32] : memref<32x130xf32, #tpu.memory_space<vmem>>, vector<32x128xf32>
    %c0_33 = arith.constant 0 : index
    %c0_34 = arith.constant 0 : index
    %c0_35 = arith.constant 0 : index
    %c0_36 = arith.constant 0 : index
    %29 = vector.load %arg4[%c0_33, %c0_34, %c0_35, %c0_36] : memref<2x2x32x32xf32, #tpu.memory_space<vmem>>, vector<1x1x32x32xf32>
    %30 = vector.shape_cast %29 : vector<1x1x32x32xf32> to vector<32x32xf32>
    %cst_37 = arith.constant dense<0.000000e+00> : vector<32x128xf32>
    %31 = tpu.matmul %30, %28, %cst_37 {dimension_numbers = #tpu.dot_dimension_numbers<[1], [0], [0], [1], [0, 0, 1, 1], [], []>} : vector<32x32xf32>, vector<32x128xf32>, vector<32x128xf32> -> vector<32x128xf32>
    %32 = arith.addf %27, %31 : vector<32x128xf32>
    %c0_38 = arith.constant 0 : index
    %c0_39 = arith.constant 0 : index
    %c0_40 = arith.constant 0 : index
    %33 = vector.load %arg5[%c0_38, %c0_39, %c0_40] : memref<2x32x1xf32, #tpu.memory_space<vmem>>, vector<1x32x1xf32>
    %34 = vector.shape_cast %33 : vector<1x32x1xf32> to vector<32x1xf32>
    %35 = vector.broadcast %34 : vector<32x1xf32> to vector<32x128xf32>
    %36 = arith.addf %32, %35 : vector<32x128xf32>
    %37 = arith.addf %36, %5 : vector<32x128xf32>
    %cst_41 = arith.constant 0.000000e+00 : f32
    %38 = vector.broadcast %cst_41 : f32 to vector<32x128xf32>
    %39 = arith.cmpf ogt, %37, %38 : vector<32x128xf32>
    %cst_42 = arith.constant 0.00999999977 : f32
    %40 = vector.broadcast %cst_42 : f32 to vector<32x128xf32>
    %41 = arith.mulf %40, %37 : vector<32x128xf32>
    %42 = arith.select %39, %37, %41 : vector<32x128xi1>, vector<32x128xf32>
    %c0_43 = arith.constant 0 : index
    %c2_44 = arith.constant 2 : index
    %43 = vector.load %arg7[%c0_43, %c2_44] : memref<32x130xf32, #tpu.memory_space<vmem>>, vector<32x128xf32>
    tpu.vector_store %arg7[%c0_43, %c2_44], %42 {strides = array<i32>} : memref<32x130xf32, #tpu.memory_space<vmem>>, vector<32x128xf32>,
    %c1_45 = arith.constant 1 : index
    %c1_46 = arith.constant 1 : index
    %c0_47 = arith.constant 0 : index
    %c0_48 = arith.constant 0 : index
    %44 = vector.load %arg2[%c1_45, %c1_46, %c0_47, %c0_48] : memref<2x2x32x32xf32, #tpu.memory_space<vmem>>, vector<1x1x32x32xf32>
    %45 = vector.shape_cast %44 : vector<1x1x32x32xf32> to vector<32x32xf32>
    %cst_49 = arith.constant dense<0.000000e+00> : vector<32x128xf32>
    %46 = tpu.matmul %45, %42, %cst_49 {dimension_numbers = #tpu.dot_dimension_numbers<[1], [0], [0], [1], [0, 0, 1, 1], [], []>} : vector<32x32xf32>, vector<32x128xf32>, vector<32x128xf32> -> vector<32x128xf32>
    %c0_50 = arith.constant 0 : index
    %c0_51 = arith.constant 0 : index
    %47 = vector.load %arg7[%c0_50, %c0_51] : memref<32x130xf32, #tpu.memory_space<vmem>>, vector<32x128xf32>
    %c1_52 = arith.constant 1 : index
    %c0_53 = arith.constant 0 : index
    %c0_54 = arith.constant 0 : index
    %c0_55 = arith.constant 0 : index
    %48 = vector.load %arg2[%c1_52, %c0_53, %c0_54, %c0_55] : memref<2x2x32x32xf32, #tpu.memory_space<vmem>>, vector<1x1x32x32xf32>
    %49 = vector.shape_cast %48 : vector<1x1x32x32xf32> to vector<32x32xf32>
    %cst_56 = arith.constant dense<0.000000e+00> : vector<32x128xf32>
    %50 = tpu.matmul %49, %47, %cst_56 {dimension_numbers = #tpu.dot_dimension_numbers<[1], [0], [0], [1], [0, 0, 1, 1], [], []>} : vector<32x32xf32>, vector<32x128xf32>, vector<32x128xf32> -> vector<32x128xf32>
    %51 = arith.addf %46, %50 : vector<32x128xf32>
    %c1_57 = arith.constant 1 : index
    %c0_58 = arith.constant 0 : index
    %c0_59 = arith.constant 0 : index
    %52 = vector.load %arg3[%c1_57, %c0_58, %c0_59] : memref<2x32x1xf32, #tpu.memory_space<vmem>>, vector<1x32x1xf32>
    %53 = vector.shape_cast %52 : vector<1x32x1xf32> to vector<32x1xf32>
    %54 = vector.broadcast %53 : vector<32x1xf32> to vector<32x128xf32>
    %55 = arith.addf %51, %54 : vector<32x128xf32>
    %cst_60 = arith.constant 0.000000e+00 : f32
    %56 = vector.broadcast %cst_60 : f32 to vector<32x128xf32>
    %57 = arith.cmpf ogt, %55, %56 : vector<32x128xf32>
    %cst_61 = arith.constant 0.00999999977 : f32
    %58 = vector.broadcast %cst_61 : f32 to vector<32x128xf32>
    %59 = arith.mulf %58, %55 : vector<32x128xf32>
    %60 = arith.select %57, %55, %59 : vector<32x128xi1>, vector<32x128xf32>
    %c0_62 = arith.constant 0 : index
    %c2_63 = arith.constant 2 : index
    %61 = vector.load %arg8[%c0_62, %c2_63] : memref<32x130xf32, #tpu.memory_space<vmem>>, vector<32x128xf32>
    tpu.vector_store %arg8[%c0_62, %c2_63], %60 {strides = array<i32>} : memref<32x130xf32, #tpu.memory_space<vmem>>, vector<32x128xf32>,
    %c1_64 = arith.constant 1 : index
    %c1_65 = arith.constant 1 : index
    %c0_66 = arith.constant 0 : index
    %c0_67 = arith.constant 0 : index
    %62 = vector.load %arg4[%c1_64, %c1_65, %c0_66, %c0_67] : memref<2x2x32x32xf32, #tpu.memory_space<vmem>>, vector<1x1x32x32xf32>
    %63 = vector.shape_cast %62 : vector<1x1x32x32xf32> to vector<32x32xf32>
    %cst_68 = arith.constant dense<0.000000e+00> : vector<32x128xf32>
    %64 = tpu.matmul %63, %60, %cst_68 {dimension_numbers = #tpu.dot_dimension_numbers<[1], [0], [0], [1], [0, 0, 1, 1], [], []>} : vector<32x32xf32>, vector<32x128xf32>, vector<32x128xf32> -> vector<32x128xf32>
    %c0_69 = arith.constant 0 : index
    %c0_70 = arith.constant 0 : index
    %65 = vector.load %arg8[%c0_69, %c0_70] : memref<32x130xf32, #tpu.memory_space<vmem>>, vector<32x128xf32>
    %c1_71 = arith.constant 1 : index
    %c0_72 = arith.constant 0 : index
    %c0_73 = arith.constant 0 : index
    %c0_74 = arith.constant 0 : index
    %66 = vector.load %arg4[%c1_71, %c0_72, %c0_73, %c0_74] : memref<2x2x32x32xf32, #tpu.memory_space<vmem>>, vector<1x1x32x32xf32>
    %67 = vector.shape_cast %66 : vector<1x1x32x32xf32> to vector<32x32xf32>
    %cst_75 = arith.constant dense<0.000000e+00> : vector<32x128xf32>
    %68 = tpu.matmul %67, %65, %cst_75 {dimension_numbers = #tpu.dot_dimension_numbers<[1], [0], [0], [1], [0, 0, 1, 1], [], []>} : vector<32x32xf32>, vector<32x128xf32>, vector<32x128xf32> -> vector<32x128xf32>
    %69 = arith.addf %64, %68 : vector<32x128xf32>
    %c1_76 = arith.constant 1 : index
    %c0_77 = arith.constant 0 : index
    %c0_78 = arith.constant 0 : index
    %70 = vector.load %arg5[%c1_76, %c0_77, %c0_78] : memref<2x32x1xf32, #tpu.memory_space<vmem>>, vector<1x32x1xf32>
    %71 = vector.shape_cast %70 : vector<1x32x1xf32> to vector<32x1xf32>
    %72 = vector.broadcast %71 : vector<32x1xf32> to vector<32x128xf32>
    %73 = arith.addf %69, %72 : vector<32x128xf32>
    %74 = arith.addf %73, %42 : vector<32x128xf32>
    %cst_79 = arith.constant 0.000000e+00 : f32
    %75 = vector.broadcast %cst_79 : f32 to vector<32x128xf32>
    %76 = arith.cmpf ogt, %74, %75 : vector<32x128xf32>
    %cst_80 = arith.constant 0.00999999977 : f32
    %77 = vector.broadcast %cst_80 : f32 to vector<32x128xf32>
    %78 = arith.mulf %77, %74 : vector<32x128xf32>
    %79 = arith.select %76, %74, %78 : vector<32x128xi1>, vector<32x128xf32>
    %c0_81 = arith.constant 0 : index
    %c0_82 = arith.constant 0 : index
    %c0_83 = arith.constant 0 : index
    %80 = vector.load %arg6[%c0_81, %c0_82, %c0_83] : memref<1x32x128xf32, #tpu.memory_space<vmem>>, vector<1x32x128xf32>
    %81 = vector.shape_cast %80 : vector<1x32x128xf32> to vector<32x128xf32>
    %82 = vector.shape_cast %79 : vector<32x128xf32> to vector<1x32x128xf32>
    tpu.vector_store %arg6[%c0_81, %c0_82, %c0_83], %82 {strides = array<i32>} : memref<1x32x128xf32, #tpu.memory_space<vmem>>, vector<1x32x128xf32>,
    return
  }
  func.func @transform_0(%arg0: i32) -> (i32, i32, i32) {
    %c0_i32 = arith.constant 0 : i32
    %c0_i32_0 = arith.constant 0 : i32
    %c0_i32_1 = arith.constant 0 : i32
    return %arg0, %c0_i32, %c0_i32_0 : i32, i32, i32
  }
  func.func @transform_1(%arg0: i32) -> (i32, i32, i32, i32) {
    %c0_i32 = arith.constant 0 : i32
    %c0_i32_0 = arith.constant 0 : i32
    %c0_i32_1 = arith.constant 0 : i32
    %c0_i32_2 = arith.constant 0 : i32
    %c0_i32_3 = arith.constant 0 : i32
    return %c0_i32, %c0_i32_0, %c0_i32_1, %c0_i32_2 : i32, i32, i32, i32
  }
  func.func @transform_2(%arg0: i32) -> (i32, i32, i32) {
    %c0_i32 = arith.constant 0 : i32
    %c0_i32_0 = arith.constant 0 : i32
    %c0_i32_1 = arith.constant 0 : i32
    %c0_i32_2 = arith.constant 0 : i32
    return %c0_i32, %c0_i32_0, %c0_i32_1 : i32, i32, i32
  }
  func.func @transform_3(%arg0: i32) -> (i32, i32, i32, i32) {
    %c0_i32 = arith.constant 0 : i32
    %c0_i32_0 = arith.constant 0 : i32
    %c0_i32_1 = arith.constant 0 : i32
    %c0_i32_2 = arith.constant 0 : i32
    %c0_i32_3 = arith.constant 0 : i32
    return %c0_i32, %c0_i32_0, %c0_i32_1, %c0_i32_2 : i32, i32, i32, i32
  }
  func.func @transform_4(%arg0: i32) -> (i32, i32, i32) {
    %c0_i32 = arith.constant 0 : i32
    %c0_i32_0 = arith.constant 0 : i32
    %c0_i32_1 = arith.constant 0 : i32
    %c0_i32_2 = arith.constant 0 : i32
    return %c0_i32, %c0_i32_0, %c0_i32_1 : i32, i32, i32
  }
  func.func @transform_5(%arg0: i32) -> (i32, i32, i32) {
    %c0_i32 = arith.constant 0 : i32
    %c0_i32_0 = arith.constant 0 : i32
    %c0_i32_1 = arith.constant 0 : i32
    return %arg0, %c0_i32, %c0_i32_0 : i32, i32, i32
  }
}

</mosaic_0001>

<llo_original>
// kernel: tpu_custom_call.1
$region0: #{tpu_custom_call.1}
  #allocation0 [shape = 'u32[]', space=smem, size = 0x4, offset = 0x4, fixed_abs, tag = 'smem constant byte address 0x4 - core index']
  #allocation1 [shape = 'u32[72,128]{1,0:T(1,128)}', space=vmem, size = 0x9000, scoped, tag = 'internal scratch']
  #allocation2 [shape = 'f32[32,130]{1,0:T(8,128)}', space=vmem, size = 0x8000, scoped, tag = 'scratch operand']
  #allocation3 [shape = 'f32[32,130]{1,0:T(8,128)}', space=vmem, size = 0x8000, scoped, tag = 'scratch operand']
  %s0 = inlined_call_operand.hbm [shape: f32[2,32,128], index: 0, kind: input, shape index: {}]
  %s1 = inlined_call_operand.vmem [shape: f32[2,2,32,32], index: 1, kind: input, shape index: {}]
  %s2 = inlined_call_operand.vmem [shape: f32[2,32,1], index: 2, kind: input, shape index: {}]
  %s3 = inlined_call_operand.hbm [shape: f32[2,2,32,32], index: 3, kind: input, shape index: {}]
  %s4 = inlined_call_operand.vmem [shape: f32[2,32,1], index: 4, kind: input, shape index: {}]
  %s5 = inlined_call_operand.hbm [shape: f32[2,32,128], index: 5, kind: output, shape index: {}]
  %s6 = sld [smem:[#allocation0]]
  $region61: #{tpu_custom_call.1} parent=0
    _
  %s8 = ssub.s32 1, %s6
  %s9 = scalar_select 0, %s8, %s6
  $region1: #{tpu_custom_call.1} parent=0
    #allocation4 [shape = 'u8[32768]{0}', space=vmem, size = 0x8000, scoped, tag = 'input window, operand 0']
    #allocation5 [shape = 's32[2]{0}', space=sflag, size = 0x8, scoped, tag = 'scoped memory for tpu_custom_call.1']
    #allocation6 [shape = 's32[2]{0}', space=sflag, size = 0x8, scoped, tag = 'scoped memory for tpu_custom_call.1']
    #allocation7 [shape = 'u8[65536]{0}', space=vmem, size = 0x10000, scoped, tag = 'input window, operand 3, single buffered']
    #allocation8 [shape = 's32[1]{0}', space=sflag, size = 0x4, scoped, tag = 'scoped memory for tpu_custom_call.1']
    #allocation9 [shape = 'u8[32768]{0}', space=vmem, size = 0x8000, scoped, tag = 'output window, operand 0']
    %10 = vsyncpa [#allocation5], 0
    %s11 = scalar_lea.sflag [#allocation5], 1
    %12 = vsyncpa %s11, 0
    %13 = vsyncpa [#allocation8], 0
    %14 = vsyncpa [#allocation6], 0
    %s15 = scalar_lea.sflag [#allocation6], 1
    %16 = vsyncpa %s15, 0
    loop: start=0, step=1, limit=4
    $region2: #{tpu_custom_call.1} parent=1 // loop_pre_header
      _
    $region3: #{tpu_custom_call.1} parent=1 // loop_header
      %s18 = sphi 0, %s22
      %p19 = scmp.ge.s32.totalorder %s18, 4
      %s28 = sphi 0, %s30
      %s31 = sphi 0, %s28
      %s32 = sphi 0, %s31
      %s48 = sphi 0, %s32
      %s52 = sphi 0, %s52
      %s54 = sphi 0, %s52
      %s55 = sphi 0, %s54
      %s69 = sphi 0, %s55
      %s73 = sphi 0, %s73
      %s75 = sphi 0, %s73
      %s76 = sphi 0, %s75
      %s90 = sphi 0, %s76
      %s94 = sphi 0, %s94
      %s96 = sphi 0, %s94
      %s97 = sphi 0, %s96
      %s111 = sphi 0, %s97
      %s115 = sphi 0, %s115
      %s117 = sphi 0, %s115
      %s118 = sphi 0, %s117
      %s132 = sphi 0, %s118
      %s138 = sphi 0, %s140
      %s141 = sphi 0, %s138
      %s142 = sphi 0, %s141
      %s158 = sphi 0, %s142
    $region4: #{tpu_custom_call.1} parent=1 // loop_header_branch
      %21 = sbr.rel (%p19) target = $region8
    $region5: #{tpu_custom_call.1} parent=1 // loop_body
      %s23 = ssub.s32 %s18, 1
      %s24 = ssub.s32 %s18, 2
      %s25 = sadd.s32 %s18, 1
      %s26 = ssub.s32 %s18, %s25
      %p27 = scmp.eq.s32.totalorder %s26, 0
      %s29 = sadd.s32 %s28, 1
      %s30 = scalar_select %p27, %s28, %s29
      %p33 = pneg %p27
      %p34 = scmp.eq.s32.totalorder %s18, 1
      %p35 = por %p33, %p34
      %p36 = scmp.ne.s32.totalorder %s28, %s31
      %p37 = scmp.eq.s32.totalorder %s18, 0
      %p38 = por %p36, %p37
      %p39 = scmp.ne.s32.totalorder %s28, %s31
      %p40 = scmp.eq.s32.totalorder %s23, 1
      %p41 = por %p39, %p40
      %p42 = scmp.ne.s32.totalorder %s31, %s32
      %p43 = scmp.eq.s32.totalorder %s23, 0
      %p44 = por %p42, %p43
      %p45 = scmp.ne.s32.totalorder %s31, %s32
      %p46 = scmp.eq.s32.totalorder %s24, 1
      %p47 = por %p45, %p46
      %p49 = scmp.ne.s32.totalorder %s32, %s48
      %p50 = scmp.eq.s32.totalorder %s24, 0
      %p51 = por %p49, %p50
      %s53 = sadd.s32 %s52, 1
      %p56 = scmp.eq.s32.totalorder %s18, 1
      %p57 = scmp.ne.s32.totalorder %s52, %s54
      %p58 = scmp.eq.s32.totalorder %s18, 0
      %p59 = por %p57, %p58
      %p60 = scmp.ne.s32.totalorder %s52, %s54
      %p61 = scmp.eq.s32.totalorder %s23, 1
      %p62 = por %p60, %p61
      %p63 = scmp.ne.s32.totalorder %s54, %s55
      %p64 = scmp.eq.s32.totalorder %s23, 0
      %p65 = por %p63, %p64
      %p66 = scmp.ne.s32.totalorder %s54, %s55
      %p67 = scmp.eq.s32.totalorder %s24, 1
      %p68 = por %p66, %p67
      %p70 = scmp.ne.s32.totalorder %s55, %s69
      %p71 = scmp.eq.s32.totalorder %s24, 0
      %p72 = por %p70, %p71
      %s74 = sadd.s32 %s73, 1
      %p77 = scmp.eq.s32.totalorder %s18, 1
      %p78 = scmp.ne.s32.totalorder %s73, %s75
      %p79 = scmp.eq.s32.totalorder %s18, 0
      %p80 = por %p78, %p79
      %p81 = scmp.ne.s32.totalorder %s73, %s75
      %p82 = scmp.eq.s32.totalorder %s23, 1
      %p83 = por %p81, %p82
      %p84 = scmp.ne.s32.totalorder %s75, %s76
      %p85 = scmp.eq.s32.totalorder %s23, 0
      %p86 = por %p84, %p85
      %p87 = scmp.ne.s32.totalorder %s75, %s76
      %p88 = scmp.eq.s32.totalorder %s24, 1
      %p89 = por %p87, %p88
      %p91 = scmp.ne.s32.totalorder %s76, %s90
      %p92 = scmp.eq.s32.totalorder %s24, 0
      %p93 = por %p91, %p92
      %s95 = sadd.s32 %s94, 1
      %p98 = scmp.eq.s32.totalorder %s18, 1
      %p99 = scmp.ne.s32.totalorder %s94, %s96
      %p100 = scmp.eq.s32.totalorder %s18, 0
      %p101 = por %p99, %p100
      %p102 = scmp.ne.s32.totalorder %s94, %s96
      %p103 = scmp.eq.s32.totalorder %s23, 1
      %p104 = por %p102, %p103
      %p105 = scmp.ne.s32.totalorder %s96, %s97
      %p106 = scmp.eq.s32.totalorder %s23, 0
      %p107 = por %p105, %p106
      %p108 = scmp.ne.s32.totalorder %s96, %s97
      %p109 = scmp.eq.s32.totalorder %s24, 1
      %p110 = por %p108, %p109
      %p112 = scmp.ne.s32.totalorder %s97, %s111
      %p113 = scmp.eq.s32.totalorder %s24, 0
      %p114 = por %p112, %p113
      %s116 = sadd.s32 %s115, 1
      %p119 = scmp.eq.s32.totalorder %s18, 1
      %p120 = scmp.ne.s32.totalorder %s115, %s117
      %p121 = scmp.eq.s32.totalorder %s18, 0
      %p122 = por %p120, %p121
      %p123 = scmp.ne.s32.totalorder %s115, %s117
      %p124 = scmp.eq.s32.totalorder %s23, 1
      %p125 = por %p123, %p124
      %p126 = scmp.ne.s32.totalorder %s117, %s118
      %p127 = scmp.eq.s32.totalorder %s23, 0
      %p128 = por %p126, %p127
      %p129 = scmp.ne.s32.totalorder %s117, %s118
      %p130 = scmp.eq.s32.totalorder %s24, 1
      %p131 = por %p129, %p130
      %p133 = scmp.ne.s32.totalorder %s118, %s132
      %p134 = scmp.eq.s32.totalorder %s24, 0
      %p135 = por %p133, %p134
      %s136 = ssub.s32 %s18, %s25
      %p137 = scmp.eq.s32.totalorder %s136, 0
      %s139 = sadd.s32 %s138, 1
      %s140 = scalar_select %p137, %s138, %s139
      %p143 = pneg %p137
      %p144 = scmp.eq.s32.totalorder %s18, 1
      %p145 = por %p143, %p144
      %p146 = scmp.ne.s32.totalorder %s138, %s141
      %p147 = scmp.eq.s32.totalorder %s18, 0
      %p148 = por %p146, %p147
      %p149 = scmp.ne.s32.totalorder %s138, %s141
      %p150 = scmp.eq.s32.totalorder %s23, 1
      %p151 = por %p149, %p150
      %p152 = scmp.ne.s32.totalorder %s141, %s142
      %p153 = scmp.eq.s32.totalorder %s23, 0
      %p154 = por %p152, %p153
      %p155 = scmp.ne.s32.totalorder %s141, %s142
      %p156 = scmp.eq.s32.totalorder %s24, 1
      %p157 = por %p155, %p156
      %p159 = scmp.ne.s32.totalorder %s142, %s158
      %p160 = scmp.eq.s32.totalorder %s24, 0
      %p161 = por %p159, %p160
      %p162 = scmp.le.s32.totalorder 1, %s18
      %p163 = scmp.lt.s32.totalorder %s18, 3
      %p164 = pnand %p162, %p163
      %p165 = pneg %p164
      // Predicated region
      $region9: #{tpu_custom_call.1} parent=5 // pred_check
        _
      $region10: #{tpu_custom_call.1} parent=5 // pred_check_branch
        %167 = sbr.rel (%p164) target = $region12
      $region11: #{tpu_custom_call.1} parent=5 // pred_region
        %s168 = ssub.s32 %s18, 1
        // Predicated region
        $region13: #{tpu_custom_call.1} parent=11 // pred_check
          %p169 = pneg %p65
        $region14: #{tpu_custom_call.1} parent=11 // pred_check_branch
          %171 = sbr.rel (%p169) target = $region16
        $region15: #{tpu_custom_call.1} parent=11 // pred_region
          _
        $region16: #{tpu_custom_call.1} parent=11 // pred_fallthru
          _
        // Predicated region
        $region17: #{tpu_custom_call.1} parent=11 // pred_check
          %p172 = pneg %p86
        $region18: #{tpu_custom_call.1} parent=11 // pred_check_branch
          %174 = sbr.rel (%p172) target = $region20
        $region19: #{tpu_custom_call.1} parent=11 // pred_region
          _
        $region20: #{tpu_custom_call.1} parent=11 // pred_fallthru
          _
        // Predicated region
        $region21: #{tpu_custom_call.1} parent=11 // pred_check
          %p175 = pneg %p107
        $region22: #{tpu_custom_call.1} parent=11 // pred_check_branch
          %177 = sbr.rel (%p175) target = $region24
        $region23: #{tpu_custom_call.1} parent=11 // pred_region
          %179 = vsyncadd [#allocation8], 0
          %s180 = sshll.u32 %s3, 4
          %s181 = int_to_ptr.hbm [resolvable:$true] %s180
          %s182 = sshll.u32 [#allocation7], 4
          %s183 = int_to_ptr.vmem [resolvable:$true] %s182
          %188 = dma.hbm_to_vmem [thread:$0]  %s181, 2048, %s183, [#allocation8], 128, 128, 8
        $region24: #{tpu_custom_call.1} parent=11 // pred_fallthru
          _
        // Predicated region
        $region25: #{tpu_custom_call.1} parent=11 // pred_check
          %p189 = pneg %p128
        $region26: #{tpu_custom_call.1} parent=11 // pred_check_branch
          %191 = sbr.rel (%p189) target = $region28
        $region27: #{tpu_custom_call.1} parent=11 // pred_region
          _
        $region28: #{tpu_custom_call.1} parent=11 // pred_fallthru
          _
      $region12: #{tpu_custom_call.1} parent=5 // pred_fallthru
        _
      %p192 = scmp.lt.s32.totalorder %s18, 2
      // Predicated region
      $region29: #{tpu_custom_call.1} parent=5 // pred_check
        %p193 = pneg %p192
      $region30: #{tpu_custom_call.1} parent=5 // pred_check_branch
        %195 = sbr.rel (%p193) target = $region32
      $region31: #{tpu_custom_call.1} parent=5 // pred_region
        // Predicated region
        $region33: #{tpu_custom_call.1} parent=31 // pred_check
          %p196 = pneg %p38
        $region34: #{tpu_custom_call.1} parent=31 // pred_check_branch
          %198 = sbr.rel (%p196) target = $region36
        $region35: #{tpu_custom_call.1} parent=31 // pred_region
          %s199 = sand.u32 %s28, 1
          %s200 = scalar_lea.sflag [#allocation5], %s199
          %s201 = sand.u32 %s28, 1
          %s202 = smul.addr %s201, 32
          %s203 = scalar_lea.vmem [#allocation4], %s202
          %205 = vsyncadd %s200, 0
          %s206 = smul.addr %s18, 4
          %s207 = smul.addr %s206, 8
          %s208 = scalar_lea.hbm %s0, %s207
          %s209 = sshll.u32 %s208, 4
          %s210 = int_to_ptr.hbm [resolvable:$true] %s209
          %s211 = sshll.u32 %s203, 4
          %s212 = int_to_ptr.vmem [resolvable:$true] %s211
          %217 = dma.hbm_to_vmem [thread:$0]  %s210, 512, %s212, %s200, 128, 128, 8
        $region36: #{tpu_custom_call.1} parent=31 // pred_fallthru
          _
      $region32: #{tpu_custom_call.1} parent=5 // pred_fallthru
        _
      %p218 = scmp.le.s32.totalorder 1, %s18
      %p219 = scmp.lt.s32.totalorder %s18, 3
      %p220 = pnand %p218, %p219
      %p221 = pneg %p220
      // Predicated region
      $region37: #{tpu_custom_call.1} parent=5 // pred_check
        _
      $region38: #{tpu_custom_call.1} parent=5 // pred_check_branch
        %223 = sbr.rel (%p220) target = $region40
      $region39: #{tpu_custom_call.1} parent=5 // pred_region
        %s224 = ssub.s32 %s18, 1
        %s225 = sand.u32 %s31, 1
        %s226 = scalar_lea.sflag [#allocation5], %s225
        %s227 = sand.u32 %s31, 1
        %s228 = smul.addr %s227, 32
        %s229 = scalar_lea.vmem [#allocation4], %s228
        // Predicated region
        $region41: #{tpu_custom_call.1} parent=39 // pred_check
          %p230 = pneg %p44
        $region42: #{tpu_custom_call.1} parent=39 // pred_check_branch
          %232 = sbr.rel (%p230) target = $region44
        $region43: #{tpu_custom_call.1} parent=39 // pred_region
          %234 = dma.done %s226, 512
        $region44: #{tpu_custom_call.1} parent=39 // pred_fallthru
          _
        // Predicated region
        $region45: #{tpu_custom_call.1} parent=39 // pred_check
          %p235 = pneg %p107
        $region46: #{tpu_custom_call.1} parent=39 // pred_check_branch
          %237 = sbr.rel (%p235) target = $region48
        $region47: #{tpu_custom_call.1} parent=39 // pred_region
          %239 = dma.done [#allocation8], 2048
        $region48: #{tpu_custom_call.1} parent=39 // pred_fallthru
          _
        %s240 = sand.u32 %s31, 1
        %s241 = scalar_lea.sflag [#allocation5], %s240
        %s242 = sand.u32 %s31, 1
        %s243 = smul.addr %s242, 32
        %s244 = scalar_lea.vmem [#allocation4], %s243
        %p245 = pneg %p44
        %p246 = pneg %p41
        %p247 = pneg %p65
        %p248 = pneg %p62
        %p249 = pneg %p86
        %p250 = pneg %p83
        %p251 = pneg %p107
        %p252 = pneg %p104
        %p253 = pneg %p128
        %p254 = pneg %p125
        %p255 = pneg %p154
        %p256 = pneg %p151
        %s257 = sand.u32 %s141, 1
        %s258 = scalar_lea.sflag [#allocation6], %s257
        %s259 = sand.u32 %s141, 1
        %s260 = smul.addr %s259, 32
        %s261 = scalar_lea.vmem [#allocation9], %s260
        %vm262 = vcmask 15360
        %263 = vst.msk [vmem:[#allocation2] sm:$0xff] %vm262, 0.0
        %264 = vst.msk [vmem:[#allocation2 + $0x10] sm:$0xff] %vm262, 0.0
        %265 = vst.msk [vmem:[#allocation2 + $0x20] sm:$0xff] %vm262, 0.0
        %266 = vst.msk [vmem:[#allocation2 + $0x30] sm:$0xff] %vm262, 0.0
        %267 = vst.msk [vmem:[#allocation3] sm:$0xff] %vm262, 0.0
        %268 = vst.msk [vmem:[#allocation3 + $0x10] sm:$0xff] %vm262, 0.0
        %269 = vst.msk [vmem:[#allocation3 + $0x20] sm:$0xff] %vm262, 0.0
        %270 = vst.msk [vmem:[#allocation3 + $0x30] sm:$0xff] %vm262, 0.0
        %v271 = vld [vmem:[%s229] sm:$0xff]
        %v272 = vld [vmem:[%s229 + $0x8] sm:$0xff]
        %v273 = vld [vmem:[%s229 + $0x10] sm:$0xff]
        %v274 = vld [vmem:[%s229 + $0x18] sm:$0xff]
        %279 = vrot.lane.b32.xlu0 %v271, 2
        %v280 = vpop.permute.xlu0 %279
        %281 = vrot.lane.b32.xlu0 %v272, 2
        %v282 = vpop.permute.xlu0 %281
        %283 = vrot.lane.b32.xlu0 %v273, 2
        %v284 = vpop.permute.xlu0 %283
        %285 = vrot.lane.b32.xlu0 %v274, 2
        %v286 = vpop.permute.xlu0 %285
        %vm291 = vcmask 1047568
        %292 = vst.msk [vmem:[#allocation2] sm:$0xff] %vm291, %v280
        %293 = vst.msk [vmem:[#allocation2 + $0x8] sm:$0xff] %vm262, %v280
        %294 = vst.msk [vmem:[#allocation2 + $0x10] sm:$0xff] %vm291, %v282
        %295 = vst.msk [vmem:[#allocation2 + $0x18] sm:$0xff] %vm262, %v282
        %296 = vst.msk [vmem:[#allocation2 + $0x20] sm:$0xff] %vm291, %v284
        %297 = vst.msk [vmem:[#allocation2 + $0x28] sm:$0xff] %vm262, %v284
        %298 = vst.msk [vmem:[#allocation2 + $0x30] sm:$0xff] %vm291, %v286
        %299 = vst.msk [vmem:[#allocation2 + $0x38] sm:$0xff] %vm262, %v286
        %s300 = scalar_lea.vmem %s1, 32
        %v301 = vld [vmem:[%s300] sm:$0xff]
        %v302 = vld [vmem:[%s300 + $0x8] sm:$0xff]
        %v303 = vld [vmem:[%s300 + $0x10] sm:$0xff]
        %v304 = vld [vmem:[%s300 + $0x18] sm:$0xff]
        %v305 = vld [vmem:[#allocation2] sm:$0xff]
        %v306 = vld [vmem:[#allocation2 + $0x8] sm:$0xff]
        %v307 = vld [vmem:[#allocation2 + $0x10] sm:$0xff]
        %v308 = vld [vmem:[#allocation2 + $0x18] sm:$0xff]
        %v309 = vld [vmem:[#allocation2 + $0x20] sm:$0xff]
        %v310 = vld [vmem:[#allocation2 + $0x28] sm:$0xff]
        %v311 = vld [vmem:[#allocation2 + $0x30] sm:$0xff]
        %v312 = vld [vmem:[#allocation2 + $0x38] sm:$0xff]
        %v313 = vld [vmem:[%s1] sm:$0xff]
        %v314 = vld [vmem:[%s1 + $0x8] sm:$0xff]
        %v315 = vld [vmem:[%s1 + $0x10] sm:$0xff]
        %v316 = vld [vmem:[%s1 + $0x18] sm:$0xff]
        %325 = vrot.lane.b32.xlu0 %v305, 127
        %v326 = vpop.permute.xlu0 %325
        %327 = vrot.lane.b32.xlu0 %v306, 127
        %v328 = vpop.permute.xlu0 %327
        %329 = vrot.lane.b32.xlu0 %v307, 127
        %v330 = vpop.permute.xlu0 %329
        %331 = vrot.lane.b32.xlu0 %v308, 127
        %v332 = vpop.permute.xlu0 %331
        %333 = vrot.lane.b32.xlu0 %v309, 127
        %v334 = vpop.permute.xlu0 %333
        %335 = vrot.lane.b32.xlu0 %v310, 127
        %v336 = vpop.permute.xlu0 %335
        %337 = vrot.lane.b32.xlu0 %v311, 127
        %v338 = vpop.permute.xlu0 %337
        %339 = vrot.lane.b32.xlu0 %v312, 127
        %v340 = vpop.permute.xlu0 %339
        %vm341 = vcmask 1039360
        %v342 = vsel %vm341, %v326, %v328
        %v343 = vsel %vm341, %v330, %v332
        %v344 = vsel %vm341, %v334, %v336
        %v345 = vsel %vm341, %v338, %v340
        %vm350 = vcmask 261120
        %v352 = vsel %vm350, %v313, 0
        %v355 = vsel %vm350, %v314, 0
        %v358 = vsel %vm350, %v315, 0
        %v361 = vsel %vm350, %v316, 0
        %363 = vmatpush.msra.mxu0 0.0
        %364 = vmatpush.msra.mxu0 0.0
        %365 = vmatpush.msra.mxu0 0.0
        %366 = vmatpush.msra.mxu0 0.0
        %367 = vmatpush.msra.mxu0 0.0
        %368 = vmatpush.msra.mxu0 0.0
        %369 = vmatpush.msra.mxu0 0.0
        %370 = vmatpush.msra.mxu0 0.0
        %371 = vmatpush.msra.mxu0 0.0
        %372 = vmatpush.msra.mxu0 0.0
        %373 = vmatpush.msra.mxu0 0.0
        %374 = vmatpush.msra.mxu0 0.0
        %375 = vmatpush.msra.mxu0 %v345
        %376 = vmatpush.msra.mxu0 %v344
        %377 = vmatpush.msra.mxu0 %v343
        %378 = vmatpush.msra.mxu0 %v342
        %379 = vmatmul.f32.gmra.mxu0 %v352
        %v380 = vpop.f32.mrf.mxu0
        %v381 = vadd.f32 0.0, %v380
        %382 = vmatmul.f32.gmra.mxu0 %v355
        %v383 = vpop.f32.mrf.mxu0
        %v384 = vadd.f32 0.0, %v383
        %385 = vmatmul.f32.gmra.mxu0 %v358
        %v386 = vpop.f32.mrf.mxu0
        %v387 = vadd.f32 0.0, %v386
        %388 = vmatmul.f32.gmra.mxu0 %v361
        %v389 = vpop.f32.mrf.mxu0
        %v390 = vadd.f32 0.0, %v389
        %391 = vdwg.mxu0
        %v393 = vsel %vm350, %v301, 0
        %v396 = vsel %vm350, %v302, 0
        %v399 = vsel %vm350, %v303, 0
        %v402 = vsel %vm350, %v304, 0
        %404 = vmatpush.msra.mxu0 0.0
        %405 = vmatpush.msra.mxu0 0.0
        %406 = vmatpush.msra.mxu0 0.0
        %407 = vmatpush.msra.mxu0 0.0
        %408 = vmatpush.msra.mxu0 0.0
        %409 = vmatpush.msra.mxu0 0.0
        %410 = vmatpush.msra.mxu0 0.0
        %411 = vmatpush.msra.mxu0 0.0
        %412 = vmatpush.msra.mxu0 0.0
        %413 = vmatpush.msra.mxu0 0.0
        %414 = vmatpush.msra.mxu0 0.0
        %415 = vmatpush.msra.mxu0 0.0
        %416 = vmatpush.msra.mxu0 %v274
        %417 = vmatpush.msra.mxu0 %v273
        %418 = vmatpush.msra.mxu0 %v272
        %419 = vmatpush.msra.mxu0 %v271
        %420 = vmatmul.f32.gmra.mxu0 %v393
        %v421 = vpop.f32.mrf.mxu0
        %v422 = vadd.f32 %v381, %v421
        %423 = vmatmul.f32.gmra.mxu0 %v396
        %v424 = vpop.f32.mrf.mxu0
        %v425 = vadd.f32 %v384, %v424
        %426 = vmatmul.f32.gmra.mxu0 %v399
        %v427 = vpop.f32.mrf.mxu0
        %v428 = vadd.f32 %v387, %v427
        %429 = vmatmul.f32.gmra.mxu0 %v402
        %v430 = vpop.f32.mrf.mxu0
        %v431 = vadd.f32 %v390, %v430
        %432 = vdwg.mxu0
        %v433 = vld [vmem:[%s2] sm:$0xff]
        %v434 = vld [vmem:[%s2 + $0x8] sm:$0xff]
        %v435 = vld [vmem:[%s2 + $0x10] sm:$0xff]
        %v436 = vld [vmem:[%s2 + $0x18] sm:$0xff]
        %438 = vset.pattern.permute.xlu0 0
        %439 = vperm.xlu0 %438, %v433
        %v440 = vpop.permute.xlu0 %439
        %443 = vset.pattern.permute.xlu0 0
        %444 = vperm.xlu0 %443, %v434
        %v445 = vpop.permute.xlu0 %444
        %448 = vset.pattern.permute.xlu0 0
        %449 = vperm.xlu0 %448, %v435
        %v450 = vpop.permute.xlu0 %449
        %453 = vset.pattern.permute.xlu0 0
        %454 = vperm.xlu0 %453, %v436
        %v455 = vpop.permute.xlu0 %454
        %v457 = vadd.f32 %v422, %v440
        %v458 = vadd.f32 %v425, %v445
        %v459 = vadd.f32 %v428, %v450
        %v460 = vadd.f32 %v431, %v455
        %vm461 = vcmp.gt.f32.partialorder %v457, 0.0
        %vm462 = vcmp.gt.f32.partialorder %v458, 0.0
        %vm463 = vcmp.gt.f32.partialorder %v459, 0.0
        %vm464 = vcmp.gt.f32.partialorder %v460, 0.0
        %v465 = vmul.f32 %v457, 0.01
        %v466 = vmul.f32 %v458, 0.01
        %v467 = vmul.f32 %v459, 0.01
        %v468 = vmul.f32 %v460, 0.01
        %v469 = vsel %vm461, %v457, %v465
        %v470 = vsel %vm462, %v458, %v466
        %v471 = vsel %vm463, %v459, %v467
        %v472 = vsel %vm464, %v460, %v468
        %477 = vrot.lane.b32.xlu0 %v469, 2
        %v478 = vpop.permute.xlu0 %477
        %479 = vrot.lane.b32.xlu0 %v470, 2
        %v480 = vpop.permute.xlu0 %479
        %481 = vrot.lane.b32.xlu0 %v471, 2
        %v482 = vpop.permute.xlu0 %481
        %483 = vrot.lane.b32.xlu0 %v472, 2
        %v484 = vpop.permute.xlu0 %483
        %489 = vst.msk [vmem:[#allocation3] sm:$0xff] %vm291, %v478
        %490 = vst.msk [vmem:[#allocation3 + $0x8] sm:$0xff] %vm262, %v478
        %491 = vst.msk [vmem:[#allocation3 + $0x10] sm:$0xff] %vm291, %v480
        %492 = vst.msk [vmem:[#allocation3 + $0x18] sm:$0xff] %vm262, %v480
        %493 = vst.msk [vmem:[#allocation3 + $0x20] sm:$0xff] %vm291, %v482
        %494 = vst.msk [vmem:[#allocation3 + $0x28] sm:$0xff] %vm262, %v482
        %495 = vst.msk [vmem:[#allocation3 + $0x30] sm:$0xff] %vm291, %v484
        %496 = vst.msk [vmem:[#allocation3 + $0x38] sm:$0xff] %vm262, %v484
        %s497 = scalar_lea.vmem [#allocation7], 32
        %v498 = vld [vmem:[%s497] sm:$0xff]
        %v499 = vld [vmem:[%s497 + $0x8] sm:$0xff]
        %v500 = vld [vmem:[%s497 + $0x10] sm:$0xff]
        %v501 = vld [vmem:[%s497 + $0x18] sm:$0xff]
        %v502 = vld [vmem:[#allocation3] sm:$0xff]
        %v503 = vld [vmem:[#allocation3 + $0x8] sm:$0xff]
        %v504 = vld [vmem:[#allocation3 + $0x10] sm:$0xff]
        %v505 = vld [vmem:[#allocation3 + $0x18] sm:$0xff]
        %v506 = vld [vmem:[#allocation3 + $0x20] sm:$0xff]
        %v507 = vld [vmem:[#allocation3 + $0x28] sm:$0xff]
        %v508 = vld [vmem:[#allocation3 + $0x30] sm:$0xff]
        %v509 = vld [vmem:[#allocation3 + $0x38] sm:$0xff]
        %v510 = vld [vmem:[#allocation7] sm:$0xff]
        %v511 = vld [vmem:[#allocation7 + $0x8] sm:$0xff]
        %v512 = vld [vmem:[#allocation7 + $0x10] sm:$0xff]
        %v513 = vld [vmem:[#allocation7 + $0x18] sm:$0xff]
        %522 = vrot.lane.b32.xlu0 %v502, 127
        %v523 = vpop.permute.xlu0 %522
        %524 = vrot.lane.b32.xlu0 %v503, 127
        %v525 = vpop.permute.xlu0 %524
        %526 = vrot.lane.b32.xlu0 %v504, 127
        %v527 = vpop.permute.xlu0 %526
        %528 = vrot.lane.b32.xlu0 %v505, 127
        %v529 = vpop.permute.xlu0 %528
        %530 = vrot.lane.b32.xlu0 %v506, 127
        %v531 = vpop.permute.xlu0 %530
        %532 = vrot.lane.b32.xlu0 %v507, 127
        %v533 = vpop.permute.xlu0 %532
        %534 = vrot.lane.b32.xlu0 %v508, 127
        %v535 = vpop.permute.xlu0 %534
        %536 = vrot.lane.b32.xlu0 %v509, 127
        %v537 = vpop.permute.xlu0 %536
        %v538 = vsel %vm341, %v523, %v525
        %v539 = vsel %vm341, %v527, %v529
        %v540 = vsel %vm341, %v531, %v533
        %v541 = vsel %vm341, %v535, %v537
        %v547 = vsel %vm350, %v510, 0
        %v550 = vsel %vm350, %v511, 0
        %v553 = vsel %vm350, %v512, 0
        %v556 = vsel %vm350, %v513, 0
        %558 = vmatpush.msra.mxu0 0.0
        %559 = vmatpush.msra.mxu0 0.0
        %560 = vmatpush.msra.mxu0 0.0
        %561 = vmatpush.msra.mxu0 0.0
        %562 = vmatpush.msra.mxu0 0.0
        %563 = vmatpush.msra.mxu0 0.0
        %564 = vmatpush.msra.mxu0 0.0
        %565 = vmatpush.msra.mxu0 0.0
        %566 = vmatpush.msra.mxu0 0.0
        %567 = vmatpush.msra.mxu0 0.0
        %568 = vmatpush.msra.mxu0 0.0
        %569 = vmatpush.msra.mxu0 0.0
        %570 = vmatpush.msra.mxu0 %v541
        %571 = vmatpush.msra.mxu0 %v540
        %572 = vmatpush.msra.mxu0 %v539
        %573 = vmatpush.msra.mxu0 %v538
        %574 = vmatmul.f32.gmra.mxu0 %v547
        %v575 = vpop.f32.mrf.mxu0
        %v576 = vadd.f32 0.0, %v575
        %577 = vmatmul.f32.gmra.mxu0 %v550
        %v578 = vpop.f32.mrf.mxu0
        %v579 = vadd.f32 0.0, %v578
        %580 = vmatmul.f32.gmra.mxu0 %v553
        %v581 = vpop.f32.mrf.mxu0
        %v582 = vadd.f32 0.0, %v581
        %583 = vmatmul.f32.gmra.mxu0 %v556
        %v584 = vpop.f32.mrf.mxu0
        %v585 = vadd.f32 0.0, %v584
        %586 = vdwg.mxu0
        %v588 = vsel %vm350, %v498, 0
        %v591 = vsel %vm350, %v499, 0
        %v594 = vsel %vm350, %v500, 0
        %v597 = vsel %vm350, %v501, 0
        %599 = vmatpush.msra.mxu0 0.0
        %600 = vmatpush.msra.mxu0 0.0
        %601 = vmatpush.msra.mxu0 0.0
        %602 = vmatpush.msra.mxu0 0.0
        %603 = vmatpush.msra.mxu0 0.0
        %604 = vmatpush.msra.mxu0 0.0
        %605 = vmatpush.msra.mxu0 0.0
        %606 = vmatpush.msra.mxu0 0.0
        %607 = vmatpush.msra.mxu0 0.0
        %608 = vmatpush.msra.mxu0 0.0
        %609 = vmatpush.msra.mxu0 0.0
        %610 = vmatpush.msra.mxu0 0.0
        %611 = vmatpush.msra.mxu0 %v472
        %612 = vmatpush.msra.mxu0 %v471
        %613 = vmatpush.msra.mxu0 %v470
        %614 = vmatpush.msra.mxu0 %v469
        %615 = vmatmul.f32.gmra.mxu0 %v588
        %v616 = vpop.f32.mrf.mxu0
        %v617 = vadd.f32 %v576, %v616
        %618 = vmatmul.f32.gmra.mxu0 %v591
        %v619 = vpop.f32.mrf.mxu0
        %v620 = vadd.f32 %v579, %v619
        %621 = vmatmul.f32.gmra.mxu0 %v594
        %v622 = vpop.f32.mrf.mxu0
        %v623 = vadd.f32 %v582, %v622
        %624 = vmatmul.f32.gmra.mxu0 %v597
        %v625 = vpop.f32.mrf.mxu0
        %v626 = vadd.f32 %v585, %v625
        %627 = vdwg.mxu0
        %v628 = vld [vmem:[%s4] sm:$0xff]
        %v629 = vld [vmem:[%s4 + $0x8] sm:$0xff]
        %v630 = vld [vmem:[%s4 + $0x10] sm:$0xff]
        %v631 = vld [vmem:[%s4 + $0x18] sm:$0xff]
        %633 = vset.pattern.permute.xlu0 0
        %634 = vperm.xlu0 %633, %v628
        %v635 = vpop.permute.xlu0 %634
        %638 = vset.pattern.permute.xlu0 0
        %639 = vperm.xlu0 %638, %v629
        %v640 = vpop.permute.xlu0 %639
        %643 = vset.pattern.permute.xlu0 0
        %644 = vperm.xlu0 %643, %v630
        %v645 = vpop.permute.xlu0 %644
        %648 = vset.pattern.permute.xlu0 0
        %649 = vperm.xlu0 %648, %v631
        %v650 = vpop.permute.xlu0 %649
        %v652 = vadd.f32 %v617, %v635
        %v653 = vadd.f32 %v620, %v640
        %v654 = vadd.f32 %v623, %v645
        %v655 = vadd.f32 %v626, %v650
        %v656 = vadd.f32 %v652, %v271
        %v657 = vadd.f32 %v653, %v272
        %v658 = vadd.f32 %v654, %v273
        %v659 = vadd.f32 %v655, %v274
        %vm660 = vcmp.gt.f32.partialorder %v656, 0.0
        %vm661 = vcmp.gt.f32.partialorder %v657, 0.0
        %vm662 = vcmp.gt.f32.partialorder %v658, 0.0
        %vm663 = vcmp.gt.f32.partialorder %v659, 0.0
        %v664 = vmul.f32 %v656, 0.01
        %v665 = vmul.f32 %v657, 0.01
        %v666 = vmul.f32 %v658, 0.01
        %v667 = vmul.f32 %v659, 0.01
        %v668 = vsel %vm660, %v656, %v664
        %v669 = vsel %vm661, %v657, %v665
        %v670 = vsel %vm662, %v658, %v666
        %v671 = vsel %vm663, %v659, %v667
        %676 = vrot.lane.b32.xlu0 %v668, 2
        %v677 = vpop.permute.xlu0 %676
        %678 = vrot.lane.b32.xlu0 %v669, 2
        %v679 = vpop.permute.xlu0 %678
        %680 = vrot.lane.b32.xlu0 %v670, 2
        %v681 = vpop.permute.xlu0 %680
        %682 = vrot.lane.b32.xlu0 %v671, 2
        %v683 = vpop.permute.xlu0 %682
        %688 = vst.msk [vmem:[#allocation2] sm:$0xff] %vm291, %v677
        %689 = vst.msk [vmem:[#allocation2 + $0x8] sm:$0xff] %vm262, %v677
        %690 = vst.msk [vmem:[#allocation2 + $0x10] sm:$0xff] %vm291, %v679
        %691 = vst.msk [vmem:[#allocation2 + $0x18] sm:$0xff] %vm262, %v679
        %692 = vst.msk [vmem:[#allocation2 + $0x20] sm:$0xff] %vm291, %v681
        %693 = vst.msk [vmem:[#allocation2 + $0x28] sm:$0xff] %vm262, %v681
        %694 = vst.msk [vmem:[#allocation2 + $0x30] sm:$0xff] %vm291, %v683
        %695 = vst.msk [vmem:[#allocation2 + $0x38] sm:$0xff] %vm262, %v683
        %s696 = scalar_lea.vmem %s1, 96
        %v697 = vld [vmem:[%s696] sm:$0xff]
        %v698 = vld [vmem:[%s696 + $0x8] sm:$0xff]
        %v699 = vld [vmem:[%s696 + $0x10] sm:$0xff]
        %v700 = vld [vmem:[%s696 + $0x18] sm:$0xff]
        %v701 = vld [vmem:[#allocation2] sm:$0xff]
        %v702 = vld [vmem:[#allocation2 + $0x10] sm:$0xff]
        %v703 = vld [vmem:[#allocation2 + $0x20] sm:$0xff]
        %v704 = vld [vmem:[#allocation2 + $0x30] sm:$0xff]
        %s705 = scalar_lea.vmem %s1, 64
        %v706 = vld [vmem:[%s705] sm:$0xff]
        %v707 = vld [vmem:[%s705 + $0x8] sm:$0xff]
        %v708 = vld [vmem:[%s705 + $0x10] sm:$0xff]
        %v709 = vld [vmem:[%s705 + $0x18] sm:$0xff]
        %v711 = vsel %vm350, %v706, 0
        %v714 = vsel %vm350, %v707, 0
        %v717 = vsel %vm350, %v708, 0
        %v720 = vsel %vm350, %v709, 0
        %722 = vmatpush.msra.mxu0 0.0
        %723 = vmatpush.msra.mxu0 0.0
        %724 = vmatpush.msra.mxu0 0.0
        %725 = vmatpush.msra.mxu0 0.0
        %726 = vmatpush.msra.mxu0 0.0
        %727 = vmatpush.msra.mxu0 0.0
        %728 = vmatpush.msra.mxu0 0.0
        %729 = vmatpush.msra.mxu0 0.0
        %730 = vmatpush.msra.mxu0 0.0
        %731 = vmatpush.msra.mxu0 0.0
        %732 = vmatpush.msra.mxu0 0.0
        %733 = vmatpush.msra.mxu0 0.0
        %734 = vmatpush.msra.mxu0 %v704
        %735 = vmatpush.msra.mxu0 %v703
        %736 = vmatpush.msra.mxu0 %v702
        %737 = vmatpush.msra.mxu0 %v701
        %738 = vmatmul.f32.gmra.mxu0 %v711
        %v739 = vpop.f32.mrf.mxu0
        %v740 = vadd.f32 0.0, %v739
        %741 = vmatmul.f32.gmra.mxu0 %v714
        %v742 = vpop.f32.mrf.mxu0
        %v743 = vadd.f32 0.0, %v742
        %744 = vmatmul.f32.gmra.mxu0 %v717
        %v745 = vpop.f32.mrf.mxu0
        %v746 = vadd.f32 0.0, %v745
        %747 = vmatmul.f32.gmra.mxu0 %v720
        %v748 = vpop.f32.mrf.mxu0
        %v749 = vadd.f32 0.0, %v748
        %750 = vdwg.mxu0
        %v752 = vsel %vm350, %v697, 0
        %v755 = vsel %vm350, %v698, 0
        %v758 = vsel %vm350, %v699, 0
        %v761 = vsel %vm350, %v700, 0
        %763 = vmatpush.msra.mxu0 0.0
        %764 = vmatpush.msra.mxu0 0.0
        %765 = vmatpush.msra.mxu0 0.0
        %766 = vmatpush.msra.mxu0 0.0
        %767 = vmatpush.msra.mxu0 0.0
        %768 = vmatpush.msra.mxu0 0.0
        %769 = vmatpush.msra.mxu0 0.0
        %770 = vmatpush.msra.mxu0 0.0
        %771 = vmatpush.msra.mxu0 0.0
        %772 = vmatpush.msra.mxu0 0.0
        %773 = vmatpush.msra.mxu0 0.0
        %774 = vmatpush.msra.mxu0 0.0
        %775 = vmatpush.msra.mxu0 %v671
        %776 = vmatpush.msra.mxu0 %v670
        %777 = vmatpush.msra.mxu0 %v669
        %778 = vmatpush.msra.mxu0 %v668
        %779 = vmatmul.f32.gmra.mxu0 %v752
        %v780 = vpop.f32.mrf.mxu0
        %v781 = vadd.f32 %v740, %v780
        %782 = vmatmul.f32.gmra.mxu0 %v755
        %v783 = vpop.f32.mrf.mxu0
        %v784 = vadd.f32 %v743, %v783
        %785 = vmatmul.f32.gmra.mxu0 %v758
        %v786 = vpop.f32.mrf.mxu0
        %v787 = vadd.f32 %v746, %v786
        %788 = vmatmul.f32.gmra.mxu0 %v761
        %v789 = vpop.f32.mrf.mxu0
        %v790 = vadd.f32 %v749, %v789
        %791 = vdwg.mxu0
        %s792 = scalar_lea.vmem %s2, 32
        %v793 = vld [vmem:[%s792] sm:$0xff]
        %v794 = vld [vmem:[%s792 + $0x8] sm:$0xff]
        %v795 = vld [vmem:[%s792 + $0x10] sm:$0xff]
        %v796 = vld [vmem:[%s792 + $0x18] sm:$0xff]
        %798 = vset.pattern.permute.xlu0 0
        %799 = vperm.xlu0 %798, %v793
        %v800 = vpop.permute.xlu0 %799
        %803 = vset.pattern.permute.xlu0 0
        %804 = vperm.xlu0 %803, %v794
        %v805 = vpop.permute.xlu0 %804
        %808 = vset.pattern.permute.xlu0 0
        %809 = vperm.xlu0 %808, %v795
        %v810 = vpop.permute.xlu0 %809
        %813 = vset.pattern.permute.xlu0 0
        %814 = vperm.xlu0 %813, %v796
        %v815 = vpop.permute.xlu0 %814
        %v817 = vadd.f32 %v781, %v800
        %v818 = vadd.f32 %v784, %v805
        %v819 = vadd.f32 %v787, %v810
        %v820 = vadd.f32 %v790, %v815
        %vm821 = vcmp.gt.f32.partialorder %v817, 0.0
        %vm822 = vcmp.gt.f32.partialorder %v818, 0.0
        %vm823 = vcmp.gt.f32.partialorder %v819, 0.0
        %vm824 = vcmp.gt.f32.partialorder %v820, 0.0
        %v825 = vmul.f32 %v817, 0.01
        %v826 = vmul.f32 %v818, 0.01
        %v827 = vmul.f32 %v819, 0.01
        %v828 = vmul.f32 %v820, 0.01
        %v829 = vsel %vm821, %v817, %v825
        %v830 = vsel %vm822, %v818, %v826
        %v831 = vsel %vm823, %v819, %v827
        %v832 = vsel %vm824, %v820, %v828
        %837 = vrot.lane.b32.xlu0 %v829, 2
        %v838 = vpop.permute.xlu0 %837
        %839 = vrot.lane.b32.xlu0 %v830, 2
        %v840 = vpop.permute.xlu0 %839
        %841 = vrot.lane.b32.xlu0 %v831, 2
        %v842 = vpop.permute.xlu0 %841
        %843 = vrot.lane.b32.xlu0 %v832, 2
        %v844 = vpop.permute.xlu0 %843
        %849 = vst.msk [vmem:[#allocation3] sm:$0xff] %vm291, %v838
        %850 = vst.msk [vmem:[#allocation3 + $0x8] sm:$0xff] %vm262, %v838
        %851 = vst.msk [vmem:[#allocation3 + $0x10] sm:$0xff] %vm291, %v840
        %852 = vst.msk [vmem:[#allocation3 + $0x18] sm:$0xff] %vm262, %v840
        %853 = vst.msk [vmem:[#allocation3 + $0x20] sm:$0xff] %vm291, %v842
        %854 = vst.msk [vmem:[#allocation3 + $0x28] sm:$0xff] %vm262, %v842
        %855 = vst.msk [vmem:[#allocation3 + $0x30] sm:$0xff] %vm291, %v844
        %856 = vst.msk [vmem:[#allocation3 + $0x38] sm:$0xff] %vm262, %v844
        %s857 = scalar_lea.vmem [#allocation7], 96
        %v858 = vld [vmem:[%s857] sm:$0xff]
        %v859 = vld [vmem:[%s857 + $0x8] sm:$0xff]
        %v860 = vld [vmem:[%s857 + $0x10] sm:$0xff]
        %v861 = vld [vmem:[%s857 + $0x18] sm:$0xff]
        %v862 = vld [vmem:[#allocation3] sm:$0xff]
        %v863 = vld [vmem:[#allocation3 + $0x10] sm:$0xff]
        %v864 = vld [vmem:[#allocation3 + $0x20] sm:$0xff]
        %v865 = vld [vmem:[#allocation3 + $0x30] sm:$0xff]
        %s866 = scalar_lea.vmem [#allocation7], 64
        %v867 = vld [vmem:[%s866] sm:$0xff]
        %v868 = vld [vmem:[%s866 + $0x8] sm:$0xff]
        %v869 = vld [vmem:[%s866 + $0x10] sm:$0xff]
        %v870 = vld [vmem:[%s866 + $0x18] sm:$0xff]
        %v872 = vsel %vm350, %v867, 0
        %v875 = vsel %vm350, %v868, 0
        %v878 = vsel %vm350, %v869, 0
        %v881 = vsel %vm350, %v870, 0
        %883 = vmatpush.msra.mxu0 0.0
        %884 = vmatpush.msra.mxu0 0.0
        %885 = vmatpush.msra.mxu0 0.0
        %886 = vmatpush.msra.mxu0 0.0
        %887 = vmatpush.msra.mxu0 0.0
        %888 = vmatpush.msra.mxu0 0.0
        %889 = vmatpush.msra.mxu0 0.0
        %890 = vmatpush.msra.mxu0 0.0
        %891 = vmatpush.msra.mxu0 0.0
        %892 = vmatpush.msra.mxu0 0.0
        %893 = vmatpush.msra.mxu0 0.0
        %894 = vmatpush.msra.mxu0 0.0
        %895 = vmatpush.msra.mxu0 %v865
        %896 = vmatpush.msra.mxu0 %v864
        %897 = vmatpush.msra.mxu0 %v863
        %898 = vmatpush.msra.mxu0 %v862
        %899 = vmatmul.f32.gmra.mxu0 %v872
        %v900 = vpop.f32.mrf.mxu0
        %v901 = vadd.f32 0.0, %v900
        %902 = vmatmul.f32.gmra.mxu0 %v875
        %v903 = vpop.f32.mrf.mxu0
        %v904 = vadd.f32 0.0, %v903
        %905 = vmatmul.f32.gmra.mxu0 %v878
        %v906 = vpop.f32.mrf.mxu0
        %v907 = vadd.f32 0.0, %v906
        %908 = vmatmul.f32.gmra.mxu0 %v881
        %v909 = vpop.f32.mrf.mxu0
        %v910 = vadd.f32 0.0, %v909
        %911 = vdwg.mxu0
        %v913 = vsel %vm350, %v858, 0
        %v916 = vsel %vm350, %v859, 0
        %v919 = vsel %vm350, %v860, 0
        %v922 = vsel %vm350, %v861, 0
        %924 = vmatpush.msra.mxu0 0.0
        %925 = vmatpush.msra.mxu0 0.0
        %926 = vmatpush.msra.mxu0 0.0
        %927 = vmatpush.msra.mxu0 0.0
        %928 = vmatpush.msra.mxu0 0.0
        %929 = vmatpush.msra.mxu0 0.0
        %930 = vmatpush.msra.mxu0 0.0
        %931 = vmatpush.msra.mxu0 0.0
        %932 = vmatpush.msra.mxu0 0.0
        %933 = vmatpush.msra.mxu0 0.0
        %934 = vmatpush.msra.mxu0 0.0
        %935 = vmatpush.msra.mxu0 0.0
        %936 = vmatpush.msra.mxu0 %v832
        %937 = vmatpush.msra.mxu0 %v831
        %938 = vmatpush.msra.mxu0 %v830
        %939 = vmatpush.msra.mxu0 %v829
        %940 = vmatmul.f32.gmra.mxu0 %v913
        %v941 = vpop.f32.mrf.mxu0
        %v942 = vadd.f32 %v901, %v941
        %943 = vmatmul.f32.gmra.mxu0 %v916
        %v944 = vpop.f32.mrf.mxu0
        %v945 = vadd.f32 %v904, %v944
        %946 = vmatmul.f32.gmra.mxu0 %v919
        %v947 = vpop.f32.mrf.mxu0
        %v948 = vadd.f32 %v907, %v947
        %949 = vmatmul.f32.gmra.mxu0 %v922
        %v950 = vpop.f32.mrf.mxu0
        %v951 = vadd.f32 %v910, %v950
        %952 = vdwg.mxu0
        %s953 = scalar_lea.vmem %s4, 32
        %v954 = vld [vmem:[%s953] sm:$0xff]
        %v955 = vld [vmem:[%s953 + $0x8] sm:$0xff]
        %v956 = vld [vmem:[%s953 + $0x10] sm:$0xff]
        %v957 = vld [vmem:[%s953 + $0x18] sm:$0xff]
        %959 = vset.pattern.permute.xlu0 0
        %960 = vperm.xlu0 %959, %v954
        %v961 = vpop.permute.xlu0 %960
        %964 = vset.pattern.permute.xlu0 0
        %965 = vperm.xlu0 %964, %v955
        %v966 = vpop.permute.xlu0 %965
        %969 = vset.pattern.permute.xlu0 0
        %970 = vperm.xlu0 %969, %v956
        %v971 = vpop.permute.xlu0 %970
        %974 = vset.pattern.permute.xlu0 0
        %975 = vperm.xlu0 %974, %v957
        %v976 = vpop.permute.xlu0 %975
        %v978 = vadd.f32 %v942, %v961
        %v979 = vadd.f32 %v945, %v966
        %v980 = vadd.f32 %v948, %v971
        %v981 = vadd.f32 %v951, %v976
        %v982 = vadd.f32 %v978, %v668
        %v983 = vadd.f32 %v979, %v669
        %v984 = vadd.f32 %v980, %v670
        %v985 = vadd.f32 %v981, %v671
        %vm986 = vcmp.gt.f32.partialorder %v982, 0.0
        %vm987 = vcmp.gt.f32.partialorder %v983, 0.0
        %vm988 = vcmp.gt.f32.partialorder %v984, 0.0
        %vm989 = vcmp.gt.f32.partialorder %v985, 0.0
        %v990 = vmul.f32 %v982, 0.01
        %v991 = vmul.f32 %v983, 0.01
        %v992 = vmul.f32 %v984, 0.01
        %v993 = vmul.f32 %v985, 0.01
        %v994 = vsel %vm986, %v982, %v990
        %v995 = vsel %vm987, %v983, %v991
        %v996 = vsel %vm988, %v984, %v992
        %v997 = vsel %vm989, %v985, %v993
        %998 = vst [vmem:[%s261] sm:$0xff] %v994
        %999 = vst [vmem:[%s261 + $0x8] sm:$0xff] %v995
        %1000 = vst [vmem:[%s261 + $0x10] sm:$0xff] %v996
        %1001 = vst [vmem:[%s261 + $0x18] sm:$0xff] %v997
        %s1002 = sand.u32 %s141, 1
        %s1003 = scalar_lea.sflag [#allocation6], %s1002
        %s1004 = sand.u32 %s141, 1
        %s1005 = smul.addr %s1004, 32
        %s1006 = scalar_lea.vmem [#allocation9], %s1005
        // Predicated region
        $region49: #{tpu_custom_call.1} parent=39 // pred_check
          %p1007 = pneg %p151
        $region50: #{tpu_custom_call.1} parent=39 // pred_check_branch
          %1009 = sbr.rel (%p1007) target = $region52
        $region51: #{tpu_custom_call.1} parent=39 // pred_region
          %1011 = vsyncadd %s1003, 0
          %s1012 = smul.addr %s23, 4
          %s1013 = smul.addr %s1012, 8
          %s1014 = scalar_lea.hbm %s5, %s1013
          %s1015 = sshll.u32 %s1006, 4
          %s1016 = int_to_ptr.vmem [resolvable:$true] %s1015
          %s1017 = sshll.u32 %s1014, 4
          %s1018 = int_to_ptr.hbm [resolvable:$true] %s1017
          %1023 = dma.vmem_to_hbm [thread:$0]  %s1016, 512, %s1018, %s1003, 128, 128, 8
        $region52: #{tpu_custom_call.1} parent=39 // pred_fallthru
          _
      $region40: #{tpu_custom_call.1} parent=5 // pred_fallthru
        _
      %p1024 = scmp.le.s32.totalorder 2, %s18
      // Predicated region
      $region53: #{tpu_custom_call.1} parent=5 // pred_check
        %p1025 = pneg %p1024
      $region54: #{tpu_custom_call.1} parent=5 // pred_check_branch
        %1027 = sbr.rel (%p1025) target = $region56
      $region55: #{tpu_custom_call.1} parent=5 // pred_region
        %s1028 = ssub.s32 %s18, 2
        // Predicated region
        $region57: #{tpu_custom_call.1} parent=55 // pred_check
          %p1029 = pneg %p157
        $region58: #{tpu_custom_call.1} parent=55 // pred_check_branch
          %1031 = sbr.rel (%p1029) target = $region60
        $region59: #{tpu_custom_call.1} parent=55 // pred_region
          %s1032 = sand.u32 %s142, 1
          %s1033 = scalar_lea.sflag [#allocation6], %s1032
          %s1034 = sand.u32 %s142, 1
          %s1035 = smul.addr %s1034, 32
          %s1036 = scalar_lea.vmem [#allocation9], %s1035
          %1038 = dma.done %s1033, 512
        $region60: #{tpu_custom_call.1} parent=55 // pred_fallthru
          _
      $region56: #{tpu_custom_call.1} parent=5 // pred_fallthru
        _
    $region6: #{tpu_custom_call.1} parent=1 // loop_footer
      %s22 = sadd.s32 1, %s18
    $region7: #{tpu_custom_call.1} parent=1 // loop_footer_branch
      %17 = sbr.rel target = $region3
    $region8: #{tpu_custom_call.1} parent=1 // loop_exit
      _
    %1039 = vsyncpa [#allocation5], 1
    %s1040 = scalar_lea.sflag [#allocation5], 1
    %1041 = vsyncpa %s1040, 1
    %1042 = vsyncpa [#allocation8], 1
    %1043 = vsyncpa [#allocation6], 1
    %s1044 = scalar_lea.sflag [#allocation6], 1
    %1045 = vsyncpa %s1044, 1

</llo_original>
